<compile_context>
chip_gen: v5e
topology: v5e:2x2
jax: 0.10.0
libtpu: 0.0.40
codegen_flags: <defaults>
</compile_context>

<pallas_src>
import functools

import jax
import jax.numpy as jnp
from jax import lax
from jax.experimental import pallas as pl
from jax.experimental.pallas import tpu as pltpu

_EPS = 1e-6  # torch.nn.functional.pairwise_distance default eps


def _round_up(x, m):
    return ((x + m - 1) // m) * m


def _contrastive_loss_kernel(margin_ref, nrows_ref, o1_ref, o2_ref, lbl_ref,
                             out_ref, *, rows_per_tile):
    c = pl.program_id(0)                    # core split      ("parallel")
    i = pl.program_id(1)                    # row tile index  ("arbitrary")
    tiles_per_split = pl.num_programs(1)

    @pl.when(i == 0)
    def _init():
        out_ref[...] = jnp.zeros_like(out_ref)

    margin = margin_ref[0]                  # SMEM scalar
    n_rows = nrows_ref[0]                   # SMEM scalar (true batch size)

    o1 = o1_ref[...].astype(jnp.float32)    # (TN, D)
    o2 = o2_ref[...].astype(jnp.float32)    # (TN, D)
    lbl = lbl_ref[...].astype(jnp.float32)  # (TN, 1)

    diff = o1 - o2 + _EPS                   # matches pairwise_distance(eps=1e-6)
    sq_sum = jnp.sum(diff * diff, axis=-1, keepdims=True)     # (TN, 1) == d**2
    d = jnp.sqrt(sq_sum)                    # only the hinge branch needs sqrt
    hinge = jnp.maximum(margin - d, 0.0)    # clamp(margin - d, min=0)
    per_row = (1.0 - lbl) * sq_sum + lbl * (hinge * hinge)    # (TN, 1)

    # Mask rows that only exist because of padding up to the tile grid.
    row0 = (c * tiles_per_split + i) * rows_per_tile
    rows = row0 + lax.broadcasted_iota(jnp.int32, per_row.shape, 0)
    per_row = jnp.where(rows < n_rows, per_row, 0.0)

    # Accumulate this tile's partial sum into the split's VMEM-resident output block.
    out_ref[0:1, 0:1] += jnp.sum(per_row, axis=0, keepdims=True)


def contrastive_loss(output1, output2, label, margin=1.0, *,
                     row_tile=8192, core_splits=2,
                     vmem_budget_bytes=24 * 1024 * 1024):
    """output1, output2: (N, D); label: (N,). Returns scalar f32 loss."""
    n, d = output1.shape

    # Row-tile choice: as large as the VMEM budget allows.  Three streamed inputs
    # (o1, o2, label), double-buffered; every block is lane-padded to >=128 lanes in
    # VMEM (a (TN, 1) f32 label block still occupies TN*128*4 bytes).
    d_lanes = _round_up(d, 128)
    bytes_per_row = 2 * (2 * d_lanes + 128) * 4
    tn_cap = max(8, (vmem_budget_bytes // bytes_per_row) // 8 * 8)
    tn = min(row_tile, tn_cap, _round_up(pl.cdiv(n, core_splits), 8))
    tiles_per_split = pl.cdiv(n, core_splits * tn)
    n_pad = core_splits * tiles_per_split * tn

    lbl2d = label.reshape(n, 1).astype(jnp.float32)
    if n_pad > n:
        pad = n_pad - n
        o1p = jnp.pad(output1, ((0, pad), (0, 0)))
        o2p = jnp.pad(output2, ((0, pad), (0, 0)))
        lblp = jnp.pad(lbl2d, ((0, pad), (0, 0)))
    else:
        o1p, o2p, lblp = output1, output2, lbl2d

    margin_arr = jnp.array([margin], dtype=jnp.float32)
    nrows_arr = jnp.array([n], dtype=jnp.int32)

    row_map = lambda c, i: (c * tiles_per_split + i, 0)

    partials = pl.pallas_call(
        functools.partial(_contrastive_loss_kernel, rows_per_tile=tn),
        grid=(core_splits, tiles_per_split),
        in_specs=[
            pl.BlockSpec(memory_space=pltpu.MemorySpace.SMEM),   # margin scalar
            pl.BlockSpec(memory_space=pltpu.MemorySpace.SMEM),   # true row count
            pl.BlockSpec((tn, d), row_map),                      # output1 row tile
            pl.BlockSpec((tn, d), row_map),                      # output2 row tile
            pl.BlockSpec((tn, 1), row_map),                      # label row tile
        ],
        out_specs=pl.BlockSpec((8, 128), lambda c, i: (c, 0)),   # per-split partial sum
        out_shape=jax.ShapeDtypeStruct((core_splits * 8, 128), jnp.float32),
        compiler_params=pltpu.CompilerParams(
            dimension_semantics=("parallel", "arbitrary"),
            vmem_limit_bytes=40 * 1024 * 1024,
        ),
    )(margin_arr, nrows_arr, o1p, o2p, lblp)

    # Tiny final reduction over the per-split partial sums + mean, in plain JAX.
    return jnp.sum(partials) / jnp.float32(n)


def _reference_loss(output1, output2, label, margin=1.0):
    # Pure-JAX reference mirroring the PyTorch semantics.
    diff = output1.astype(jnp.float32) - output2.astype(jnp.float32) + _EPS
    d = jnp.sqrt(jnp.sum(diff * diff, axis=-1))
    hinge = jnp.maximum(margin - d, 0.0)
    return jnp.mean((1.0 - label) * d ** 2 + label * hinge ** 2)


if __name__ == "__main__":
    key = jax.random.PRNGKey(0)
    k1, k2, k3 = jax.random.split(key, 3)

    N, D = 8, 32  # small siamese-net embedding batch
    output1 = jax.random.normal(k1, (N, D), dtype=jnp.float32)
    output2 = jax.random.normal(k2, (N, D), dtype=jnp.float32)
    label = jax.random.bernoulli(k3, p=0.5, shape=(N,)).astype(jnp.float32)

    loss = contrastive_loss(output1, output2, label)
    loss = jax.block_until_ready(loss)

    ref = _reference_loss(output1, output2, label)
    assert jnp.allclose(loss, ref, rtol=1e-5, atol=1e-5), (loss, ref)

    print("KERNEL_OK")
</pallas_src>

<mosaic_0001>
module attributes {stable_mosaic.version = 11 : i64} {
  func.func @_contrastive_loss_kernel(%arg0: i32, %arg1: i32, %arg2: memref<1xf32, #tpu.memory_space<smem>>, %arg3: memref<1xi32, #tpu.memory_space<smem>>, %arg4: memref<8x32xf32, #tpu.memory_space<vmem>>, %arg5: memref<8x32xf32, #tpu.memory_space<vmem>>, %arg6: memref<8x1xf32, #tpu.memory_space<vmem>>, %arg7: memref<8x128xf32, #tpu.memory_space<vmem>>) attributes {dimension_semantics = [#tpu.dimension_semantics<parallel>, #tpu.dimension_semantics<arbitrary>], iteration_bounds = array<i64: 2, 1>, scalar_prefetch = 0 : i64, scratch_operands = 0 : i64, tpu.core_type = #tpu.core_type<tc>, window_params = [{transform_indices = @transform_0, window_bounds = array<i64: 1>}, {transform_indices = @transform_1, window_bounds = array<i64: 1>}, {transform_indices = @transform_2, window_bounds = array<i64: 8, 32>}, {transform_indices = @transform_3, window_bounds = array<i64: 8, 32>}, {transform_indices = @transform_4, window_bounds = array<i64: 8, 1>}, {transform_indices = @transform_5, window_bounds = array<i64: 8, 128>}]} {
    %c0_i32 = arith.constant 0 : i32
    %0 = arith.cmpi eq, %arg1, %c0_i32 : i32
    %1 = arith.extui %0 : i1 to i32
    %c0_i32_0 = arith.constant 0 : i32
    %2 = arith.cmpi ne, %1, %c0_i32_0 : i32
    scf.if %2 {
      %cst_17 = arith.constant 0.000000e+00 : f32
      %40 = vector.broadcast %cst_17 : f32 to vector<8x128xf32>
      %c0_18 = arith.constant 0 : index
      %c0_19 = arith.constant 0 : index
      %41 = vector.load %arg7[%c0_18, %c0_19] : memref<8x128xf32, #tpu.memory_space<vmem>>, vector<8x128xf32>
      tpu.vector_store %arg7[%c0_18, %c0_19], %40 {strides = array<i32>} : memref<8x128xf32, #tpu.memory_space<vmem>>, vector<8x128xf32>,
    } else {
    }
    %c0 = arith.constant 0 : index
    %3 = memref.load %arg2[%c0] : memref<1xf32, #tpu.memory_space<smem>>
    %c0_1 = arith.constant 0 : index
    %4 = memref.load %arg3[%c0_1] : memref<1xi32, #tpu.memory_space<smem>>
    %c0_2 = arith.constant 0 : index
    %c0_3 = arith.constant 0 : index
    %5 = vector.load %arg4[%c0_2, %c0_3] : memref<8x32xf32, #tpu.memory_space<vmem>>, vector<8x32xf32>
    %c0_4 = arith.constant 0 : index
    %c0_5 = arith.constant 0 : index
    %6 = vector.load %arg5[%c0_4, %c0_5] : memref<8x32xf32, #tpu.memory_space<vmem>>, vector<8x32xf32>
    %c0_6 = arith.constant 0 : index
    %c0_7 = arith.constant 0 : index
    %7 = vector.load %arg6[%c0_6, %c0_7] : memref<8x1xf32, #tpu.memory_space<vmem>>, vector<8x1xf32>
    %8 = arith.subf %5, %6 : vector<8x32xf32>
    %cst = arith.constant 9.99999997E-7 : f32
    %9 = vector.broadcast %cst : f32 to vector<8x32xf32>
    %10 = arith.addf %8, %9 : vector<8x32xf32>
    %11 = arith.mulf %10, %10 : vector<8x32xf32>
    %cst_8 = arith.constant dense<0.000000e+00> : vector<8xf32>
    %12 = vector.multi_reduction <add>, %11, %cst_8 [1] : vector<8x32xf32> to vector<8xf32>
    %13 = vector.shape_cast %12 : vector<8xf32> to vector<8x1xf32>
    %14 = math.sqrt %13 : vector<8x1xf32>
    %15 = vector.broadcast %3 : f32 to vector<8x1xf32>
    %16 = arith.subf %15, %14 : vector<8x1xf32>
    %cst_9 = arith.constant 0.000000e+00 : f32
    %17 = vector.broadcast %cst_9 : f32 to vector<8x1xf32>
    %18 = arith.maximumf %16, %17 : vector<8x1xf32>
    %cst_10 = arith.constant 1.000000e+00 : f32
    %19 = vector.broadcast %cst_10 : f32 to vector<8x1xf32>
    %20 = arith.subf %19, %7 : vector<8x1xf32>
    %21 = arith.mulf %20, %13 : vector<8x1xf32>
    %22 = arith.mulf %18, %18 : vector<8x1xf32>
    %23 = arith.mulf %7, %22 : vector<8x1xf32>
    %24 = arith.addf %21, %23 : vector<8x1xf32>
    %c1_i32 = arith.constant 1 : i32
    %25 = arith.muli %arg0, %c1_i32 : i32
    %26 = arith.addi %25, %arg1 : i32
    %c8_i32 = arith.constant 8 : i32
    %27 = arith.muli %26, %c8_i32 : i32
    %28 = tpu.iota {dimensions = array<i32: 0>} : vector<8x1xi32>
    %29 = vector.broadcast %27 : i32 to vector<8x1xi32>
    %30 = arith.addi %29, %28 : vector<8x1xi32>
    %31 = vector.broadcast %4 : i32 to vector<8x1xi32>
    %32 = arith.cmpi slt, %30, %31 : vector<8x1xi32>
    %cst_11 = arith.constant 0.000000e+00 : f32
    %33 = vector.broadcast %cst_11 : f32 to vector<8x1xf32>
    %34 = arith.select %32, %24, %33 : vector<8x1xi1>, vector<8x1xf32>
    %c0_12 = arith.constant 0 : index
    %c0_13 = arith.constant 0 : index
    %35 = vector.load %arg7[%c0_12, %c0_13] : memref<8x128xf32, #tpu.memory_space<vmem>>, vector<1x1xf32>
    %cst_14 = arith.constant dense<0.000000e+00> : vector<1xf32>
    %36 = vector.multi_reduction <add>, %34, %cst_14 [0] : vector<8x1xf32> to vector<1xf32>
    %37 = vector.shape_cast %36 : vector<1xf32> to vector<1x1xf32>
    %38 = arith.addf %35, %37 : vector<1x1xf32>
    %c0_15 = arith.constant 0 : index
    %c0_16 = arith.constant 0 : index
    %39 = vector.load %arg7[%c0_15, %c0_16] : memref<8x128xf32, #tpu.memory_space<vmem>>, vector<1x1xf32>
    tpu.vector_store %arg7[%c0_15, %c0_16], %38 {strides = array<i32>} : memref<8x128xf32, #tpu.memory_space<vmem>>, vector<1x1xf32>,
    return
  }
  func.func @transform_0(%arg0: i32, %arg1: i32) -> i32 {
    %c0_i32 = arith.constant 0 : i32
    %c0_i32_0 = arith.constant 0 : i32
    return %c0_i32 : i32
  }
  func.func @transform_1(%arg0: i32, %arg1: i32) -> i32 {
    %c0_i32 = arith.constant 0 : i32
    %c0_i32_0 = arith.constant 0 : i32
    return %c0_i32 : i32
  }
  func.func @transform_2(%arg0: i32, %arg1: i32) -> (i32, i32) {
    %c1_i32 = arith.constant 1 : i32
    %0 = arith.muli %arg0, %c1_i32 : i32
    %1 = arith.addi %0, %arg1 : i32
    %c0_i32 = arith.constant 0 : i32
    %c0_i32_0 = arith.constant 0 : i32
    return %1, %c0_i32 : i32, i32
  }
  func.func @transform_3(%arg0: i32, %arg1: i32) -> (i32, i32) {
    %c1_i32 = arith.constant 1 : i32
    %0 = arith.muli %arg0, %c1_i32 : i32
    %1 = arith.addi %0, %arg1 : i32
    %c0_i32 = arith.constant 0 : i32
    %c0_i32_0 = arith.constant 0 : i32
    return %1, %c0_i32 : i32, i32
  }
  func.func @transform_4(%arg0: i32, %arg1: i32) -> (i32, i32) {
    %c1_i32 = arith.constant 1 : i32
    %0 = arith.muli %arg0, %c1_i32 : i32
    %1 = arith.addi %0, %arg1 : i32
    %c0_i32 = arith.constant 0 : i32
    %c0_i32_0 = arith.constant 0 : i32
    return %1, %c0_i32 : i32, i32
  }
  func.func @transform_5(%arg0: i32, %arg1: i32) -> (i32, i32) {
    %c0_i32 = arith.constant 0 : i32
    %c0_i32_0 = arith.constant 0 : i32
    return %arg0, %c0_i32 : i32, i32
  }
}

</mosaic_0001>

<llo_original>
// kernel: tpu_custom_call.1
$region0: #{tpu_custom_call.1}
  #allocation0 [shape = 'u32[]', space=smem, size = 0x4, offset = 0x4, fixed_abs, tag = 'smem constant byte address 0x4 - core index']
  #allocation1 [shape = 'u32[72,128]{1,0:T(1,128)}', space=vmem, size = 0x9000, scoped, tag = 'internal scratch']
  #allocation2 [shape = 'f32[1]{0:T(128)S(6)}', space=smem, size = 0x200, scoped, tag = 'scoped memory for tpu_custom_call.1']
  #allocation3 [shape = 's32[1]{0:T(128)S(6)}', space=smem, size = 0x200, scoped, tag = 'scoped memory for tpu_custom_call.1']
  %s0 = inlined_call_operand.<no memory space> [shape: f32[1], index: 0, kind: input, shape index: {}]
  %s1 = inlined_call_operand.<no memory space> [shape: s32[1], index: 1, kind: input, shape index: {}]
  %s2 = inlined_call_operand.vmem [shape: f32[16,32], index: 2, kind: input, shape index: {}]
  %s3 = inlined_call_operand.hbm [shape: f32[16,32], index: 3, kind: input, shape index: {}]
  %s4 = inlined_call_operand.vmem [shape: f32[16,1], index: 4, kind: input, shape index: {}]
  %s5 = inlined_call_operand.hbm [shape: f32[16,128], index: 5, kind: output, shape index: {}]
  %s6 = sld [smem:[#allocation0]]
  $region61: #{tpu_custom_call.1} parent=0
    _
  %s8 = ssub.s32 1, %s6
  %s9 = scalar_select 0, %s8, %s6
  %10 = sst [smem:[#allocation2]] %s0
  %11 = sst [smem:[#allocation3]] %s1
  $region1: #{tpu_custom_call.1} parent=0
    #allocation4 [shape = 'u8[8192]{0}', space=vmem, size = 0x2000, scoped, tag = 'input window, operand 3']
    #allocation5 [shape = 's32[2]{0}', space=sflag, size = 0x8, scoped, tag = 'scoped memory for tpu_custom_call.1']
    #allocation6 [shape = 's32[2]{0}', space=sflag, size = 0x8, scoped, tag = 'scoped memory for tpu_custom_call.1']
    #allocation7 [shape = 'u8[8192]{0}', space=vmem, size = 0x2000, scoped, tag = 'output window, operand 0']
    %12 = vsyncpa [#allocation5], 0
    %s13 = scalar_lea.sflag [#allocation5], 1
    %14 = vsyncpa %s13, 0
    %15 = vsyncpa [#allocation6], 0
    %s16 = scalar_lea.sflag [#allocation6], 1
    %17 = vsyncpa %s16, 0
    loop: start=0, step=1, limit=4
    $region2: #{tpu_custom_call.1} parent=1 // loop_pre_header
      _
    $region3: #{tpu_custom_call.1} parent=1 // loop_header
      %s19 = sphi 0, %s23
      %p20 = scmp.ge.s32.totalorder %s19, 4
      %s26 = sphi 0, %s38
      %s27 = sphi 0, %s34
      %s28 = sphi 0, %s26
      %s29 = sphi 0, %s27
      %s30 = sphi 0, %s28
      %s31 = sphi 0, %s29
      %s39 = sphi 0, %s39
      %s41 = sphi 0, %s39
      %s42 = sphi 0, %s41
      %s56 = sphi 0, %s42
      %s60 = sphi 0, %s60
      %s62 = sphi 0, %s60
      %s63 = sphi 0, %s62
      %s77 = sphi 0, %s63
      %s85 = sphi 0, %s87
      %s88 = sphi 0, %s85
      %s89 = sphi 0, %s88
      %s105 = sphi 0, %s89
      %s113 = sphi 0, %s115
      %s116 = sphi 0, %s113
      %s117 = sphi 0, %s116
      %s133 = sphi 0, %s117
      %s141 = sphi 0, %s143
      %s144 = sphi 0, %s141
      %s145 = sphi 0, %s144
      %s161 = sphi 0, %s145
      %s167 = sphi 0, %s169
      %s170 = sphi 0, %s167
      %s171 = sphi 0, %s170
      %s187 = sphi 0, %s171
    $region4: #{tpu_custom_call.1} parent=1 // loop_header_branch
      %22 = sbr.rel (%p20) target = $region8
    $region5: #{tpu_custom_call.1} parent=1 // loop_body
      %s24 = ssub.s32 %s19, 1
      %s25 = ssub.s32 %s19, 2
      %s32 = sadd.s32 1, %s27
      %p33 = scmp.ge.s32.totalorder %s32, 1
      %s34 = scalar_select %p33, 0, %s32
      %s35 = sadd.s32 1, %s26
      %s36 = scalar_select %p33, %s35, %s26
      %p37 = scmp.ge.s32.totalorder %s36, 2
      %s38 = scalar_select %p37, 0, %s36
      %s40 = sadd.s32 %s39, 1
      %p43 = scmp.eq.s32.totalorder %s19, 1
      %p44 = scmp.ne.s32.totalorder %s39, %s41
      %p45 = scmp.eq.s32.totalorder %s19, 0
      %p46 = por %p44, %p45
      %p47 = scmp.ne.s32.totalorder %s39, %s41
      %p48 = scmp.eq.s32.totalorder %s24, 1
      %p49 = por %p47, %p48
      %p50 = scmp.ne.s32.totalorder %s41, %s42
      %p51 = scmp.eq.s32.totalorder %s24, 0
      %p52 = por %p50, %p51
      %p53 = scmp.ne.s32.totalorder %s41, %s42
      %p54 = scmp.eq.s32.totalorder %s25, 1
      %p55 = por %p53, %p54
      %p57 = scmp.ne.s32.totalorder %s42, %s56
      %p58 = scmp.eq.s32.totalorder %s25, 0
      %p59 = por %p57, %p58
      %s61 = sadd.s32 %s60, 1
      %p64 = scmp.eq.s32.totalorder %s19, 1
      %p65 = scmp.ne.s32.totalorder %s60, %s62
      %p66 = scmp.eq.s32.totalorder %s19, 0
      %p67 = por %p65, %p66
      %p68 = scmp.ne.s32.totalorder %s60, %s62
      %p69 = scmp.eq.s32.totalorder %s24, 1
      %p70 = por %p68, %p69
      %p71 = scmp.ne.s32.totalorder %s62, %s63
      %p72 = scmp.eq.s32.totalorder %s24, 0
      %p73 = por %p71, %p72
      %p74 = scmp.ne.s32.totalorder %s62, %s63
      %p75 = scmp.eq.s32.totalorder %s25, 1
      %p76 = por %p74, %p75
      %p78 = scmp.ne.s32.totalorder %s63, %s77
      %p79 = scmp.eq.s32.totalorder %s25, 0
      %p80 = por %p78, %p79
      %s81 = sadd.s32 %s26, %s27
      %s82 = sadd.s32 %s38, %s34
      %s83 = ssub.s32 %s81, %s82
      %p84 = scmp.eq.s32.totalorder %s83, 0
      %s86 = sadd.s32 %s85, 1
      %s87 = scalar_select %p84, %s85, %s86
      %p90 = pneg %p84
      %p91 = scmp.eq.s32.totalorder %s19, 1
      %p92 = por %p90, %p91
      %p93 = scmp.ne.s32.totalorder %s85, %s88
      %p94 = scmp.eq.s32.totalorder %s19, 0
      %p95 = por %p93, %p94
      %p96 = scmp.ne.s32.totalorder %s85, %s88
      %p97 = scmp.eq.s32.totalorder %s24, 1
      %p98 = por %p96, %p97
      %p99 = scmp.ne.s32.totalorder %s88, %s89
      %p100 = scmp.eq.s32.totalorder %s24, 0
      %p101 = por %p99, %p100
      %p102 = scmp.ne.s32.totalorder %s88, %s89
      %p103 = scmp.eq.s32.totalorder %s25, 1
      %p104 = por %p102, %p103
      %p106 = scmp.ne.s32.totalorder %s89, %s105
      %p107 = scmp.eq.s32.totalorder %s25, 0
      %p108 = por %p106, %p107
      %s109 = sadd.s32 %s26, %s27
      %s110 = sadd.s32 %s38, %s34
      %s111 = ssub.s32 %s109, %s110
      %p112 = scmp.eq.s32.totalorder %s111, 0
      %s114 = sadd.s32 %s113, 1
      %s115 = scalar_select %p112, %s113, %s114
      %p118 = pneg %p112
      %p119 = scmp.eq.s32.totalorder %s19, 1
      %p120 = por %p118, %p119
      %p121 = scmp.ne.s32.totalorder %s113, %s116
      %p122 = scmp.eq.s32.totalorder %s19, 0
      %p123 = por %p121, %p122
      %p124 = scmp.ne.s32.totalorder %s113, %s116
      %p125 = scmp.eq.s32.totalorder %s24, 1
      %p126 = por %p124, %p125
      %p127 = scmp.ne.s32.totalorder %s116, %s117
      %p128 = scmp.eq.s32.totalorder %s24, 0
      %p129 = por %p127, %p128
      %p130 = scmp.ne.s32.totalorder %s116, %s117
      %p131 = scmp.eq.s32.totalorder %s25, 1
      %p132 = por %p130, %p131
      %p134 = scmp.ne.s32.totalorder %s117, %s133
      %p135 = scmp.eq.s32.totalorder %s25, 0
      %p136 = por %p134, %p135
      %s137 = sadd.s32 %s26, %s27
      %s138 = sadd.s32 %s38, %s34
      %s139 = ssub.s32 %s137, %s138
      %p140 = scmp.eq.s32.totalorder %s139, 0
      %s142 = sadd.s32 %s141, 1
      %s143 = scalar_select %p140, %s141, %s142
      %p146 = pneg %p140
      %p147 = scmp.eq.s32.totalorder %s19, 1
      %p148 = por %p146, %p147
      %p149 = scmp.ne.s32.totalorder %s141, %s144
      %p150 = scmp.eq.s32.totalorder %s19, 0
      %p151 = por %p149, %p150
      %p152 = scmp.ne.s32.totalorder %s141, %s144
      %p153 = scmp.eq.s32.totalorder %s24, 1
      %p154 = por %p152, %p153
      %p155 = scmp.ne.s32.totalorder %s144, %s145
      %p156 = scmp.eq.s32.totalorder %s24, 0
      %p157 = por %p155, %p156
      %p158 = scmp.ne.s32.totalorder %s144, %s145
      %p159 = scmp.eq.s32.totalorder %s25, 1
      %p160 = por %p158, %p159
      %p162 = scmp.ne.s32.totalorder %s145, %s161
      %p163 = scmp.eq.s32.totalorder %s25, 0
      %p164 = por %p162, %p163
      %s165 = ssub.s32 %s26, %s38
      %p166 = scmp.eq.s32.totalorder %s165, 0
      %s168 = sadd.s32 %s167, 1
      %s169 = scalar_select %p166, %s167, %s168
      %p172 = pneg %p166
      %p173 = scmp.eq.s32.totalorder %s19, 1
      %p174 = por %p172, %p173
      %p175 = scmp.ne.s32.totalorder %s167, %s170
      %p176 = scmp.eq.s32.totalorder %s19, 0
      %p177 = por %p175, %p176
      %p178 = scmp.ne.s32.totalorder %s167, %s170
      %p179 = scmp.eq.s32.totalorder %s24, 1
      %p180 = por %p178, %p179
      %p181 = scmp.ne.s32.totalorder %s170, %s171
      %p182 = scmp.eq.s32.totalorder %s24, 0
      %p183 = por %p181, %p182
      %p184 = scmp.ne.s32.totalorder %s170, %s171
      %p185 = scmp.eq.s32.totalorder %s25, 1
      %p186 = por %p184, %p185
      %p188 = scmp.ne.s32.totalorder %s171, %s187
      %p189 = scmp.eq.s32.totalorder %s25, 0
      %p190 = por %p188, %p189
      %p191 = scmp.le.s32.totalorder 1, %s19
      %p192 = scmp.lt.s32.totalorder %s19, 3
      %p193 = pnand %p191, %p192
      %p194 = pneg %p193
      // Predicated region
      $region9: #{tpu_custom_call.1} parent=5 // pred_check
        _
      $region10: #{tpu_custom_call.1} parent=5 // pred_check_branch
        %196 = sbr.rel (%p193) target = $region12
      $region11: #{tpu_custom_call.1} parent=5 // pred_region
        %s197 = ssub.s32 %s19, 1
        // Predicated region
        $region13: #{tpu_custom_call.1} parent=11 // pred_check
          %p198 = pneg %p52
        $region14: #{tpu_custom_call.1} parent=11 // pred_check_branch
          %200 = sbr.rel (%p198) target = $region16
        $region15: #{tpu_custom_call.1} parent=11 // pred_region
          _
        $region16: #{tpu_custom_call.1} parent=11 // pred_fallthru
          _
        // Predicated region
        $region17: #{tpu_custom_call.1} parent=11 // pred_check
          %p201 = pneg %p73
        $region18: #{tpu_custom_call.1} parent=11 // pred_check_branch
          %203 = sbr.rel (%p201) target = $region20
        $region19: #{tpu_custom_call.1} parent=11 // pred_region
          _
        $region20: #{tpu_custom_call.1} parent=11 // pred_fallthru
          _
      $region12: #{tpu_custom_call.1} parent=5 // pred_fallthru
        _
      %p204 = scmp.lt.s32.totalorder %s19, 2
      // Predicated region
      $region21: #{tpu_custom_call.1} parent=5 // pred_check
        %p205 = pneg %p204
      $region22: #{tpu_custom_call.1} parent=5 // pred_check_branch
        %207 = sbr.rel (%p205) target = $region24
      $region23: #{tpu_custom_call.1} parent=5 // pred_region
        // Predicated region
        $region25: #{tpu_custom_call.1} parent=23 // pred_check
          %p208 = pneg %p95
        $region26: #{tpu_custom_call.1} parent=23 // pred_check_branch
          %210 = sbr.rel (%p208) target = $region28
        $region27: #{tpu_custom_call.1} parent=23 // pred_region
          %s211 = sadd.s32 %s26, %s27
          %p212 = scmp.lt.s32.totalorder %s211, 1
          %s213 = scalar_select %p212, %s211, 1
          %s214 = smul.addr %s213, 8
          %s215 = scalar_lea.vmem %s2, %s214
          %s216 = sadd.s32 %s26, %s27
        $region28: #{tpu_custom_call.1} parent=23 // pred_fallthru
          _
        // Predicated region
        $region29: #{tpu_custom_call.1} parent=23 // pred_check
          %p217 = pneg %p123
        $region30: #{tpu_custom_call.1} parent=23 // pred_check_branch
          %219 = sbr.rel (%p217) target = $region32
        $region31: #{tpu_custom_call.1} parent=23 // pred_region
          %s220 = sand.u32 %s113, 1
          %s221 = scalar_lea.sflag [#allocation5], %s220
          %s222 = sand.u32 %s113, 1
          %s223 = smul.addr %s222, 8
          %s224 = scalar_lea.vmem [#allocation4], %s223
          %s225 = sadd.s32 %s26, %s27
          %227 = vsyncadd %s221, 0
          %s228 = smul.addr %s225, 8
          %s229 = scalar_lea.hbm %s3, %s228
          %s231 = sshll.u32 %s229, 4
          %s232 = int_to_ptr.hbm [resolvable:$true] %s231
          %s233 = sshll.u32 %s224, 4
          %s234 = int_to_ptr.vmem [resolvable:$true] %s233
          %236 = dma.hbm_to_vmem [thread:$0]  %s232, 128, %s234, %s221
        $region32: #{tpu_custom_call.1} parent=23 // pred_fallthru
          _
        // Predicated region
        $region33: #{tpu_custom_call.1} parent=23 // pred_check
          %p237 = pneg %p151
        $region34: #{tpu_custom_call.1} parent=23 // pred_check_branch
          %239 = sbr.rel (%p237) target = $region36
        $region35: #{tpu_custom_call.1} parent=23 // pred_region
          %s240 = sadd.s32 %s26, %s27
          %p241 = scmp.lt.s32.totalorder %s240, 1
          %s242 = scalar_select %p241, %s240, 1
          %s243 = smul.addr %s242, 8
          %s244 = scalar_lea.vmem %s4, %s243
          %s245 = sadd.s32 %s26, %s27
        $region36: #{tpu_custom_call.1} parent=23 // pred_fallthru
          _
      $region24: #{tpu_custom_call.1} parent=5 // pred_fallthru
        _
      %p246 = scmp.le.s32.totalorder 1, %s19
      %p247 = scmp.lt.s32.totalorder %s19, 3
      %p248 = pnand %p246, %p247
      %p249 = pneg %p248
      // Predicated region
      $region37: #{tpu_custom_call.1} parent=5 // pred_check
        _
      $region38: #{tpu_custom_call.1} parent=5 // pred_check_branch
        %251 = sbr.rel (%p248) target = $region40
      $region39: #{tpu_custom_call.1} parent=5 // pred_region
        %s252 = ssub.s32 %s19, 1
        %s253 = sand.u32 %s116, 1
        %s254 = scalar_lea.sflag [#allocation5], %s253
        %s255 = sand.u32 %s116, 1
        %s256 = smul.addr %s255, 8
        %s257 = scalar_lea.vmem [#allocation4], %s256
        // Predicated region
        $region41: #{tpu_custom_call.1} parent=39 // pred_check
          %p258 = pneg %p129
        $region42: #{tpu_custom_call.1} parent=39 // pred_check_branch
          %260 = sbr.rel (%p258) target = $region44
        $region43: #{tpu_custom_call.1} parent=39 // pred_region
          %262 = dma.done %s254, 128
        $region44: #{tpu_custom_call.1} parent=39 // pred_fallthru
          _
        %p263 = pneg %p52
        %p264 = pneg %p49
        %p265 = pneg %p73
        %p266 = pneg %p70
        %s267 = sadd.s32 %s28, %s29
        %p268 = scmp.lt.s32.totalorder %s267, 1
        %s269 = scalar_select %p268, %s267, 1
        %s270 = smul.addr %s269, 8
        %s271 = scalar_lea.vmem %s2, %s270
        %p272 = pneg %p101
        %p273 = pneg %p98
        %s274 = sand.u32 %s116, 1
        %s275 = scalar_lea.sflag [#allocation5], %s274
        %s276 = sand.u32 %s116, 1
        %s277 = smul.addr %s276, 8
        %s278 = scalar_lea.vmem [#allocation4], %s277
        %p279 = pneg %p129
        %p280 = pneg %p126
        %s281 = sadd.s32 %s28, %s29
        %p282 = scmp.lt.s32.totalorder %s281, 1
        %s283 = scalar_select %p282, %s281, 1
        %s284 = smul.addr %s283, 8
        %s285 = scalar_lea.vmem %s4, %s284
        %p286 = pneg %p157
        %p287 = pneg %p154
        %p288 = pneg %p183
        %p289 = pneg %p180
        %s290 = sand.u32 %s170, 1
        %s291 = scalar_lea.sflag [#allocation6], %s290
        %s292 = sand.u32 %s170, 1
        %s293 = smul.addr %s292, 8
        %s294 = scalar_lea.vmem [#allocation7], %s293
        %s295 = sadd.s32 %s28, %s29
        %p296 = scmp.lt.s32.totalorder %s295, 1
        %s297 = scalar_select %p296, %s295, 1
        %s298 = smul.addr %s297, 8
        %s299 = scalar_lea.vmem %s2, %s298
        %s300 = sadd.s32 %s28, %s29
        %s301 = sadd.s32 %s28, %s29
        %s302 = sadd.s32 %s28, %s29
        %p303 = scmp.lt.s32.totalorder %s302, 1
        %s304 = scalar_select %p303, %s302, 1
        %s305 = smul.addr %s304, 8
        %s306 = scalar_lea.vmem %s4, %s305
        %s307 = sadd.s32 %s28, %s29
        %p308 = scmp.eq.s32.totalorder %s29, 0
        // Predicated region
        $region45: #{tpu_custom_call.1} parent=39 // pred_check
          %p309 = pneg %p308
        $region46: #{tpu_custom_call.1} parent=39 // pred_check_branch
          %311 = sbr.rel (%p309) target = $region48
        $region47: #{tpu_custom_call.1} parent=39 // pred_region
          %312 = vst [vmem:[%s294] sm:$0xff] 0.0
        $region48: #{tpu_custom_call.1} parent=39 // pred_fallthru
          _
        %s313 = sld [smem:[#allocation2]]
        %s314 = sld [smem:[#allocation3]]
        %v315 = vld [vmem:[%s299] sm:$0xff]
        %v316 = vld [vmem:[%s257] sm:$0xff]
        %v317 = vld [vmem:[%s306] sm:$0xff]
        %v318 = vsub.f32 %v315, %v316
        %v319 = vadd.f32 %v318, 1e-06
        %v320 = vmul.f32 %v319, %v319
        %vm321 = vcmask 261120
        %v322 = vsel %vm321, %v320, 0.0
        %323 = vadd.xlane.f32.xlu0 %v322
        %v324 = vpop.xlane.xlu0 %323
        %v325 = vrsqrt.pop %v324
        %v326 = vmul.f32 %v325, %v324
        %v327 = vmul.f32 %v326, %v325
        %v328 = vmul.f32 0.5, %v327
        %v329 = vsub.f32 1.5, %v328
        %v330 = vmul.f32 %v325, %v329
        %v331 = vmul.f32 %v324, %v330
        %vm332 = vcmp.eq.f32.partialorder %v324, inf
        %v333 = vsel %vm332, %v324, %v331
        %vm334 = vcmp.eq.f32.partialorder %v324, 0.0
        %v335 = vand.u32 %v324, 2147483648
        %v336 = vsel %vm334, %v335, %v333
        %v337 = vstv %s313
        %v338 = vsub.f32 %v337, %v336
        %v339 = vmax.f32 %v338, 0.0
        %v340 = vsub.f32 1.0, %v317
        %v341 = vmul.f32 %v340, %v324
        %v342 = vmul.f32 %v339, %v339
        %v343 = vmul.f32 %v317, %v342
        %v344 = vadd.f32 %v341, %v343
        %s345 = sadd.s32 %s28, %s29
        %s346 = smul.u32 %s345, 8
        %v347 = vlaneseq
        %v348 = vshrl.u32 %v347, 7
        %v349 = vstv %s346
        %v350 = vadd.s32 %v349, %v348
        %v351 = vstv %s314
        %vm352 = vcmp.lt.s32.totalorder %v350, %v351
        %v353 = vsel %vm352, %v344, 0.0
        %v354 = vld [vmem:[%s294] sm:$0x1]
        %vm355 = vcmask 7168
        %v356 = vsel %vm355, %v353, 0.0
        %v357 = vrot.slane %v356, 4
        %v358 = vadd.f32 %v356, %v357
        %v359 = vrot.slane %v358, 2
        %v360 = vadd.f32 %v358, %v359
        %v361 = vrot.slane %v360, 1
        %v362 = vadd.f32 %v360, %v361
        %v363 = vadd.f32 %v354, %v362
        %vm364 = vcmask 0
        %365 = vst.msk [vmem:[%s294] sm:$0x1] %vm364, %v363
        %s366 = sand.u32 %s170, 1
        %s367 = scalar_lea.sflag [#allocation6], %s366
        %s368 = sand.u32 %s170, 1
        %s369 = smul.addr %s368, 8
        %s370 = scalar_lea.vmem [#allocation7], %s369
        // Predicated region
        $region49: #{tpu_custom_call.1} parent=39 // pred_check
          %p371 = pneg %p180
        $region50: #{tpu_custom_call.1} parent=39 // pred_check_branch
          %373 = sbr.rel (%p371) target = $region52
        $region51: #{tpu_custom_call.1} parent=39 // pred_region
          %375 = vsyncadd %s367, 0
          %s376 = smul.addr %s28, 8
          %s377 = scalar_lea.hbm %s5, %s376
          %s379 = sshll.u32 %s370, 4
          %s380 = int_to_ptr.vmem [resolvable:$true] %s379
          %s381 = sshll.u32 %s377, 4
          %s382 = int_to_ptr.hbm [resolvable:$true] %s381
          %384 = dma.vmem_to_hbm [thread:$0]  %s380, 128, %s382, %s367
        $region52: #{tpu_custom_call.1} parent=39 // pred_fallthru
          _
      $region40: #{tpu_custom_call.1} parent=5 // pred_fallthru
        _
      %p385 = scmp.le.s32.totalorder 2, %s19
      // Predicated region
      $region53: #{tpu_custom_call.1} parent=5 // pred_check
        %p386 = pneg %p385
      $region54: #{tpu_custom_call.1} parent=5 // pred_check_branch
        %388 = sbr.rel (%p386) target = $region56
      $region55: #{tpu_custom_call.1} parent=5 // pred_region
        %s389 = ssub.s32 %s19, 2
        // Predicated region
        $region57: #{tpu_custom_call.1} parent=55 // pred_check
          %p390 = pneg %p186
        $region58: #{tpu_custom_call.1} parent=55 // pred_check_branch
          %392 = sbr.rel (%p390) target = $region60
        $region59: #{tpu_custom_call.1} parent=55 // pred_region
          %s393 = sand.u32 %s171, 1
          %s394 = scalar_lea.sflag [#allocation6], %s393
          %s395 = sand.u32 %s171, 1
          %s396 = smul.addr %s395, 8
          %s397 = scalar_lea.vmem [#allocation7], %s396
          %399 = dma.done %s394, 128
        $region60: #{tpu_custom_call.1} parent=55 // pred_fallthru
          _
      $region56: #{tpu_custom_call.1} parent=5 // pred_fallthru
        _
    $region6: #{tpu_custom_call.1} parent=1 // loop_footer
      %s23 = sadd.s32 1, %s19
    $region7: #{tpu_custom_call.1} parent=1 // loop_footer_branch
      %18 = sbr.rel target = $region3
    $region8: #{tpu_custom_call.1} parent=1 // loop_exit
      _
    %400 = vsyncpa [#allocation5], 1
    %s401 = scalar_lea.sflag [#allocation5], 1
    %402 = vsyncpa %s401, 1
    %403 = vsyncpa [#allocation6], 1
    %s404 = scalar_lea.sflag [#allocation6], 1
    %405 = vsyncpa %s404, 1

</llo_original>
